<compile_context>
chip_gen: v6e
topology: v6e:2x2x1
jax: 0.10.0
libtpu: 0.0.40
codegen_flags: <defaults>
</compile_context>

<pallas_src>
import math

import jax
import jax.numpy as jnp
from jax.experimental import pallas as pl
from jax.experimental.pallas import tpu as pltpu

LANES = 128      # lane-dense width for the param slab and the output slab
OUT_COLS = 5     # [final_logit, orig_logit, bce*label, label, |age_pred - age_norm|]


# ----------------------------- helpers ---------------------------------------
def _round_up(n, m):
    return ((n + m - 1) // m) * m


def _data_cols(d_input):
    # packed input columns: [x (d_input) | age | labels | valid | zero pad to mult. of 8]
    return _round_up(d_input + 3, 8)


# ----------------------------- Pallas kernel ---------------------------------
def _make_kernel(layout, d_input):
    """layout: name -> (row_offset, in_rows, out_cols) static ints into the param slab."""

    def kernel(data_ref, p_ref, out_ref):
        data = data_ref[...]                                 # (TB, D_COLS) f32
        tb = data.shape[0]
        age = data[:, d_input:d_input + 1]
        labels = data[:, d_input + 1:d_input + 2]
        valid = data[:, d_input + 2:d_input + 3]

        def wb(name):
            off, rin, rout = layout[name]
            w = p_ref[off:off + rin, 0:rout]                 # static views into the slab
            b = p_ref[off + rin:off + rin + 1, 0:rout]
            return w, b

        def lin(h, name):
            w, b = wb(name)
            return jnp.dot(h, w, preferred_element_type=jnp.float32) + b

        def lin_relu(h, name):                               # Linear + folded eval-BN + ReLU
            return jnp.maximum(lin(h, name), 0.0)

        # ---- main trunk (Dropout = identity in eval mode) ----
        h1 = lin_relu(data, "l1")                            # (TB, d_hidden); W1 has zero rows
        feats = lin_relu(h1, "l2")                           # (TB, 16) == features (layer 6)
        c = lin_relu(feats, "l3p1")                          # fused 16->(4|8) GEMM
        h3 = c[:, 0:4]
        p1 = c[:, 4:12]
        orig_logits = lin(h3, "l4")                          # (TB, 1)

        age_norm = (age - 40.0) * (1.0 / 30.0)

        # ---- adversarial age predictor (GradientReverseLayer = identity fwd) ----
        p2 = lin_relu(p1, "p2")
        age_pred = jax.nn.sigmoid(lin(p2, "p3"))
        abs_age = jnp.abs(age_pred - age_norm) * valid       # per-row L1 partial

        # ---- age_layer -> transition prob p1 ----
        a1w, a1b = wb("a1")                                  # in_features == 1 -> VPU broadcast
        a1 = jnp.maximum(age_norm * a1w + a1b, 0.0)
        a2 = lin_relu(a1, "a2")
        # softmax([t0, t1])[1] == sigmoid(t1 - t0); the column difference is pre-folded
        # into the packed "a3" weight, so one tiny GEMM + EUP sigmoid suffices.
        p1prob = jax.nn.sigmoid(lin(a2, "a3"))               # (TB, 1)

        probs = jnp.clip(jax.nn.sigmoid(orig_logits), 1e-7, 1.0 - 1e-7)
        updated = probs * p1prob                             # bmm([1-p, p], [[1,0],[p0,p1]])[:, 1]

        # consistency BCE only over positive rows; mask BEFORE the log so negative /
        # padded rows can never inject inf * 0 = NaN.
        is_pos = labels > 0.0
        safe_upd = jnp.where(is_pos, updated, 0.5)
        bce = -(probs * jnp.log(safe_upd) + (1.0 - probs) * jnp.log(1.0 - safe_upd))
        bce_lab = jnp.where(is_pos, bce, 0.0)

        final_probs = labels * probs + (1.0 - labels) * updated
        final_logits = jnp.log(final_probs / (1.0 - final_probs + 1e-7))

        # lane-dense output slab: [final, orig, bce*label, label, |age err|, zeros...]
        out_ref[...] = jnp.concatenate(
            [final_logits, orig_logits, bce_lab, labels, abs_age,
             jnp.zeros((tb, LANES - OUT_COLS), jnp.float32)], axis=1)

    return kernel


# ----------------------------- parameter packing ------------------------------
def pack_params(raw, d_input):
    """Fold eval-mode BN into the linears, fuse shared-input GEMMs, and pack every
    weight/bias into one (rows, 128) f32 slab. Returns (slab, layout)."""

    def fold(entry):
        w = entry["w"].T.astype(jnp.float32)                 # (in, out)
        b = entry["b"].astype(jnp.float32)
        bn = entry.get("bn")
        if bn is not None:
            scale = bn["gamma"] / jnp.sqrt(bn["var"] + 1e-5)
            w = w * scale[None, :]
            b = b * scale + (bn["beta"] - bn["mean"] * scale)
        return w, b

    d_cols = _data_cols(d_input)
    blocks = {}

    w1, b1 = fold(raw["l1"])
    # zero rows for the [age | labels | valid | pad] columns of the packed data slab
    w1 = jnp.concatenate([w1, jnp.zeros((d_cols - d_input, w1.shape[1]), jnp.float32)], axis=0)
    blocks["l1"] = (w1, b1)
    blocks["l2"] = fold(raw["l2"])

    w3, b3 = fold(raw["l3"])
    wp1, bp1 = fold(raw["p1"])
    blocks["l3p1"] = (jnp.concatenate([w3, wp1], axis=1),
                      jnp.concatenate([b3, bp1], axis=0))

    blocks["l4"] = fold(raw["l4"])
    blocks["p2"] = fold(raw["p2"])
    blocks["p3"] = fold(raw["p3"])
    blocks["a1"] = fold(raw["a1"])
    blocks["a2"] = fold(raw["a2"])
    wa3, ba3 = fold(raw["a3"])
    # only softmax(pos_trans)[:, 1] is consumed downstream: fold the column difference
    blocks["a3"] = (wa3[:, 1:2] - wa3[:, 0:1], ba3[1:2] - ba3[0:1])

    layout = {}
    rows = []
    off = 0
    for name, (w, b) in blocks.items():
        rin, rout = int(w.shape[0]), int(w.shape[1])
        layout[name] = (off, rin, rout)
        blk_rows = _round_up(rin + 1, 8)                     # sublane-aligned blocks
        blk = jnp.zeros((blk_rows, LANES), jnp.float32)
        blk = blk.at[:rin, :rout].set(w)
        blk = blk.at[rin, :rout].set(b)
        rows.append(blk)
        off += blk_rows
    slab = jnp.concatenate(rows, axis=0)
    return slab, layout


# ----------------------------- wrapper ----------------------------------------
def age_aware_mlp1(x, age, labels, slab, layout, d_input, *, tile_rows=512):
    """Returns (final_logits (B,1), original_logits (B,1), final_loss ())."""
    B = x.shape[0]
    d_cols = _data_cols(d_input)
    TB = min(tile_rows, _round_up(B, 8))
    B_pad = _round_up(B, TB)

    # pack [x | age | labels | valid] into one input slab (padded rows have valid=0)
    data = jnp.zeros((B_pad, d_cols), jnp.float32)
    data = data.at[:B, :d_input].set(x.astype(jnp.float32))
    data = data.at[:B, d_input].set(age.reshape(-1).astype(jnp.float32))
    data = data.at[:B, d_input + 1].set(labels.reshape(-1).astype(jnp.float32))
    data = data.at[:B, d_input + 2].set(1.0)

    out = pl.pallas_call(
        _make_kernel(layout, d_input),
        out_shape=jax.ShapeDtypeStruct((B_pad, LANES), jnp.float32),
        grid_spec=pltpu.PrefetchScalarGridSpec(
            num_scalar_prefetch=0,
            grid=(pl.cdiv(B_pad, TB),),
            in_specs=[
                pl.BlockSpec((TB, d_cols), lambda i: (i, 0)),     # batch-tiled activations
                pl.BlockSpec(slab.shape, lambda i: (0, 0)),       # params stay VMEM-resident
            ],
            out_specs=pl.BlockSpec((TB, LANES), lambda i: (i, 0)),
        ),
        compiler_params=pltpu.CompilerParams(
            dimension_semantics=("parallel",),                    # shards across TCs on v7x
            vmem_limit_bytes=32 * 1024 * 1024,
        ),
    )(data, slab)

    final_logits = out[:B, 0:1]
    orig_logits = out[:B, 1:2]
    bce_sum = jnp.sum(out[:, 2])
    n_pos = jnp.sum(out[:, 3])
    age_abs_sum = jnp.sum(out[:, 4])
    consistency_loss = bce_sum / jnp.maximum(n_pos, 1.0)          # guard: no positives
    age_loss = age_abs_sum / B
    final_loss = 1.0 * consistency_loss + 0.5 * age_loss          # use_consist, use_adversarial
    return final_logits, orig_logits, final_loss


# ----------------------------- parameter init ---------------------------------
def init_params(key, d_input, d_hidden):
    """PyTorch-equivalent init: xavier_uniform linears, zero bias, fresh BatchNorm1d
    (eval mode), except age_layer[-1]: N(0, 0.01) weight and bias [0, 1]."""
    ks = jax.random.split(key, 10)

    def xavier(k, fan_out, fan_in):
        a = math.sqrt(6.0 / (fan_in + fan_out))
        return jax.random.uniform(k, (fan_out, fan_in), jnp.float32, -a, a)

    def bn(n):
        return dict(gamma=jnp.ones((n,), jnp.float32), beta=jnp.zeros((n,), jnp.float32),
                    mean=jnp.zeros((n,), jnp.float32), var=jnp.ones((n,), jnp.float32))

    def linear(k, fo, fi, with_bn=True):
        d = dict(w=xavier(k, fo, fi), b=jnp.zeros((fo,), jnp.float32))
        if with_bn:
            d["bn"] = bn(fo)
        return d

    return {
        "l1": linear(ks[0], d_hidden, d_input),
        "l2": linear(ks[1], 16, d_hidden),
        "l3": linear(ks[2], 4, 16),
        "l4": linear(ks[3], 1, 4, with_bn=False),
        "p1": linear(ks[4], 8, 16),
        "p2": linear(ks[5], 4, 8),
        "p3": linear(ks[6], 1, 4, with_bn=False),
        "a1": linear(ks[7], 8, 1),
        "a2": linear(ks[8], 4, 8),
        "a3": dict(w=0.01 * jax.random.normal(ks[9], (2, 4), jnp.float32),
                   b=jnp.array([0.0, 1.0], jnp.float32)),
    }


# ----------------------------- pure-JAX reference ------------------------------
def reference(x, age, labels, raw):
    def lin(h, e):
        return h @ e["w"].T + e["b"]

    def bn_eval(h, bn, eps=1e-5):
        return (h - bn["mean"]) / jnp.sqrt(bn["var"] + eps) * bn["gamma"] + bn["beta"]

    def block(h, e):
        return jnp.maximum(bn_eval(lin(h, e), e["bn"]), 0.0)

    x = x.astype(jnp.float32)
    age = age.reshape(-1, 1).astype(jnp.float32)
    labels = labels.reshape(-1, 1).astype(jnp.float32)

    h1 = block(x, raw["l1"])
    feats = block(h1, raw["l2"])
    h3 = block(feats, raw["l3"])
    orig = lin(h3, raw["l4"])

    age_norm = (age - 40.0) / 30.0
    p1 = block(feats, raw["p1"])
    p2 = block(p1, raw["p2"])
    age_pred = jax.nn.sigmoid(lin(p2, raw["p3"]))
    age_loss = jnp.mean(jnp.abs(age_pred - age_norm))

    a1 = block(age_norm, raw["a1"])
    a2 = block(a1, raw["a2"])
    pos = jax.nn.softmax(lin(a2, raw["a3"]), axis=-1)

    probs = jnp.clip(jax.nn.sigmoid(orig), 1e-7, 1.0 - 1e-7)
    upd = probs * pos[:, 1:2]
    is_pos = labels > 0.0
    safe = jnp.where(is_pos, upd, 0.5)
    bce = -(probs * jnp.log(safe) + (1.0 - probs) * jnp.log(1.0 - safe))
    closs = jnp.sum(jnp.where(is_pos, bce, 0.0)) / jnp.sum(labels)

    neg = 1.0 - labels
    fp = (1.0 - neg) * probs + neg * upd
    flog = jnp.log(fp / (1.0 - fp + 1e-7))
    return flog, orig, closs + 0.5 * age_loss


# ----------------------------- main --------------------------------------------
if __name__ == "__main__":
    key = jax.random.PRNGKey(0)
    kx, ka, kp = jax.random.split(key, 3)
    B, D_IN, D_HID = 8, 32, 32

    x = jax.random.normal(kx, (B, D_IN), jnp.float32)
    age = jax.random.uniform(ka, (B,), jnp.float32, 40.0, 70.0)
    labels = jnp.array([1, 0, 1, 0, 1, 1, 0, 0], jnp.float32)   # at least one positive

    raw = init_params(kp, D_IN, D_HID)
    slab, layout = pack_params(raw, D_IN)

    final_logits, orig_logits, final_loss = age_aware_mlp1(x, age, labels, slab, layout, D_IN)
    jax.block_until_ready((final_logits, orig_logits, final_loss))

    rf, ro, rl = reference(x, age, labels, raw)
    assert jnp.allclose(final_logits, rf, atol=1e-4, rtol=1e-4), float(jnp.max(jnp.abs(final_logits - rf)))
    assert jnp.allclose(orig_logits, ro, atol=1e-4, rtol=1e-4), float(jnp.max(jnp.abs(orig_logits - ro)))
    assert jnp.allclose(final_loss, rl, atol=1e-4, rtol=1e-4), (float(final_loss), float(rl))

    print("KERNEL_OK")
</pallas_src>

<mosaic_0001>
module attributes {stable_mosaic.version = 11 : i64} {
  func.func @kernel(%arg0: i32, %arg1: memref<8x40xf32, #tpu.memory_space<vmem>>, %arg2: memref<176x128xf32, #tpu.memory_space<vmem>>, %arg3: memref<8x128xf32, #tpu.memory_space<vmem>>) attributes {dimension_semantics = [#tpu.dimension_semantics<parallel>], iteration_bounds = array<i64: 1>, scalar_prefetch = 0 : i64, scratch_operands = 0 : i64, tpu.core_type = #tpu.core_type<tc>, window_params = [{transform_indices = @transform_0, window_bounds = array<i64: 8, 40>}, {pipeline_mode = #tpu.pipeline_mode<synchronous>, transform_indices = @transform_1, window_bounds = array<i64: 176, 128>}, {transform_indices = @transform_2, window_bounds = array<i64: 8, 128>}]} {
    %c0 = arith.constant 0 : index
    %c0_0 = arith.constant 0 : index
    %0 = vector.load %arg1[%c0, %c0_0] : memref<8x40xf32, #tpu.memory_space<vmem>>, vector<8x40xf32>
    %1 = vector.extract_strided_slice %0 {offsets = [0, 32], sizes = [8, 1], strides = [1, 1]} : vector<8x40xf32> to vector<8x1xf32>
    %2 = vector.extract_strided_slice %0 {offsets = [0, 33], sizes = [8, 1], strides = [1, 1]} : vector<8x40xf32> to vector<8x1xf32>
    %3 = vector.extract_strided_slice %0 {offsets = [0, 34], sizes = [8, 1], strides = [1, 1]} : vector<8x40xf32> to vector<8x1xf32>
    %c0_1 = arith.constant 0 : index
    %c0_2 = arith.constant 0 : index
    %4 = vector.load %arg2[%c0_1, %c0_2] : memref<176x128xf32, #tpu.memory_space<vmem>>, vector<40x32xf32>
    %c40 = arith.constant 40 : index
    %c0_3 = arith.constant 0 : index
    %5 = vector.load %arg2[%c40, %c0_3] : memref<176x128xf32, #tpu.memory_space<vmem>>, vector<1x32xf32>
    %cst = arith.constant dense<0.000000e+00> : vector<8x32xf32>
    %6 = tpu.matmul %0, %4, %cst {dimension_numbers = #tpu.dot_dimension_numbers<[1], [0], [0], [1], [0, 0, 1, 1], [], []>} : vector<8x40xf32>, vector<40x32xf32>, vector<8x32xf32> -> vector<8x32xf32>
    %7 = vector.broadcast %5 : vector<1x32xf32> to vector<8x32xf32>
    %8 = arith.addf %6, %7 : vector<8x32xf32>
    %cst_4 = arith.constant 0.000000e+00 : f32
    %9 = vector.broadcast %cst_4 : f32 to vector<8x32xf32>
    %10 = arith.maximumf %8, %9 : vector<8x32xf32>
    %c48 = arith.constant 48 : index
    %c0_5 = arith.constant 0 : index
    %11 = vector.load %arg2[%c48, %c0_5] : memref<176x128xf32, #tpu.memory_space<vmem>>, vector<32x16xf32>
    %c80 = arith.constant 80 : index
    %c0_6 = arith.constant 0 : index
    %12 = vector.load %arg2[%c80, %c0_6] : memref<176x128xf32, #tpu.memory_space<vmem>>, vector<1x16xf32>
    %cst_7 = arith.constant dense<0.000000e+00> : vector<8x16xf32>
    %13 = tpu.matmul %10, %11, %cst_7 {dimension_numbers = #tpu.dot_dimension_numbers<[1], [0], [0], [1], [0, 0, 1, 1], [], []>} : vector<8x32xf32>, vector<32x16xf32>, vector<8x16xf32> -> vector<8x16xf32>
    %14 = vector.broadcast %12 : vector<1x16xf32> to vector<8x16xf32>
    %15 = arith.addf %13, %14 : vector<8x16xf32>
    %cst_8 = arith.constant 0.000000e+00 : f32
    %16 = vector.broadcast %cst_8 : f32 to vector<8x16xf32>
    %17 = arith.maximumf %15, %16 : vector<8x16xf32>
    %c88 = arith.constant 88 : index
    %c0_9 = arith.constant 0 : index
    %18 = vector.load %arg2[%c88, %c0_9] : memref<176x128xf32, #tpu.memory_space<vmem>>, vector<16x12xf32>
    %c104 = arith.constant 104 : index
    %c0_10 = arith.constant 0 : index
    %19 = vector.load %arg2[%c104, %c0_10] : memref<176x128xf32, #tpu.memory_space<vmem>>, vector<1x12xf32>
    %cst_11 = arith.constant dense<0.000000e+00> : vector<8x12xf32>
    %20 = tpu.matmul %17, %18, %cst_11 {dimension_numbers = #tpu.dot_dimension_numbers<[1], [0], [0], [1], [0, 0, 1, 1], [], []>} : vector<8x16xf32>, vector<16x12xf32>, vector<8x12xf32> -> vector<8x12xf32>
    %21 = vector.broadcast %19 : vector<1x12xf32> to vector<8x12xf32>
    %22 = arith.addf %20, %21 : vector<8x12xf32>
    %cst_12 = arith.constant 0.000000e+00 : f32
    %23 = vector.broadcast %cst_12 : f32 to vector<8x12xf32>
    %24 = arith.maximumf %22, %23 : vector<8x12xf32>
    %25 = vector.extract_strided_slice %24 {offsets = [0, 0], sizes = [8, 4], strides = [1, 1]} : vector<8x12xf32> to vector<8x4xf32>
    %26 = vector.extract_strided_slice %24 {offsets = [0, 4], sizes = [8, 8], strides = [1, 1]} : vector<8x12xf32> to vector<8x8xf32>
    %c112 = arith.constant 112 : index
    %c0_13 = arith.constant 0 : index
    %27 = vector.load %arg2[%c112, %c0_13] : memref<176x128xf32, #tpu.memory_space<vmem>>, vector<4x1xf32>
    %c116 = arith.constant 116 : index
    %c0_14 = arith.constant 0 : index
    %28 = vector.load %arg2[%c116, %c0_14] : memref<176x128xf32, #tpu.memory_space<vmem>>, vector<1x1xf32>
    %cst_15 = arith.constant dense<0.000000e+00> : vector<8x1xf32>
    %29 = tpu.matmul %25, %27, %cst_15 {dimension_numbers = #tpu.dot_dimension_numbers<[1], [0], [0], [1], [0, 0, 1, 1], [], []>} : vector<8x4xf32>, vector<4x1xf32>, vector<8x1xf32> -> vector<8x1xf32>
    %30 = vector.broadcast %28 : vector<1x1xf32> to vector<8x1xf32>
    %31 = arith.addf %29, %30 : vector<8x1xf32>
    %cst_16 = arith.constant 4.000000e+01 : f32
    %32 = vector.broadcast %cst_16 : f32 to vector<8x1xf32>
    %33 = arith.subf %1, %32 : vector<8x1xf32>
    %cst_17 = arith.constant 0.0333333351 : f32
    %34 = vector.broadcast %cst_17 : f32 to vector<8x1xf32>
    %35 = arith.mulf %33, %34 : vector<8x1xf32>
    %c120 = arith.constant 120 : index
    %c0_18 = arith.constant 0 : index
    %36 = vector.load %arg2[%c120, %c0_18] : memref<176x128xf32, #tpu.memory_space<vmem>>, vector<8x4xf32>
    %c128 = arith.constant 128 : index
    %c0_19 = arith.constant 0 : index
    %37 = vector.load %arg2[%c128, %c0_19] : memref<176x128xf32, #tpu.memory_space<vmem>>, vector<1x4xf32>
    %cst_20 = arith.constant dense<0.000000e+00> : vector<8x4xf32>
    %38 = tpu.matmul %26, %36, %cst_20 {dimension_numbers = #tpu.dot_dimension_numbers<[1], [0], [0], [1], [0, 0, 1, 1], [], []>} : vector<8x8xf32>, vector<8x4xf32>, vector<8x4xf32> -> vector<8x4xf32>
    %39 = vector.broadcast %37 : vector<1x4xf32> to vector<8x4xf32>
    %40 = arith.addf %38, %39 : vector<8x4xf32>
    %cst_21 = arith.constant 0.000000e+00 : f32
    %41 = vector.broadcast %cst_21 : f32 to vector<8x4xf32>
    %42 = arith.maximumf %40, %41 : vector<8x4xf32>
    %c136 = arith.constant 136 : index
    %c0_22 = arith.constant 0 : index
    %43 = vector.load %arg2[%c136, %c0_22] : memref<176x128xf32, #tpu.memory_space<vmem>>, vector<4x1xf32>
    %c140 = arith.constant 140 : index
    %c0_23 = arith.constant 0 : index
    %44 = vector.load %arg2[%c140, %c0_23] : memref<176x128xf32, #tpu.memory_space<vmem>>, vector<1x1xf32>
    %cst_24 = arith.constant dense<0.000000e+00> : vector<8x1xf32>
    %45 = tpu.matmul %42, %43, %cst_24 {dimension_numbers = #tpu.dot_dimension_numbers<[1], [0], [0], [1], [0, 0, 1, 1], [], []>} : vector<8x4xf32>, vector<4x1xf32>, vector<8x1xf32> -> vector<8x1xf32>
    %46 = vector.broadcast %44 : vector<1x1xf32> to vector<8x1xf32>
    %47 = arith.addf %45, %46 : vector<8x1xf32>
    %48 = arith.negf %47 : vector<8x1xf32>
    %49 = math.exp %48 : vector<8x1xf32>
    %cst_25 = arith.constant 1.000000e+00 : f32
    %50 = vector.broadcast %cst_25 : f32 to vector<8x1xf32>
    %51 = arith.addf %50, %49 : vector<8x1xf32>
    %52 = arith.divf %50, %51 : vector<8x1xf32>
    %53 = arith.subf %52, %35 : vector<8x1xf32>
    %54 = math.absf %53 : vector<8x1xf32>
    %55 = arith.mulf %54, %3 : vector<8x1xf32>
    %c144 = arith.constant 144 : index
    %c0_26 = arith.constant 0 : index
    %56 = vector.load %arg2[%c144, %c0_26] : memref<176x128xf32, #tpu.memory_space<vmem>>, vector<1x8xf32>
    %c145 = arith.constant 145 : index
    %c0_27 = arith.constant 0 : index
    %57 = vector.load %arg2[%c145, %c0_27] : memref<176x128xf32, #tpu.memory_space<vmem>>, vector<1x8xf32>
    %58 = vector.broadcast %35 : vector<8x1xf32> to vector<8x8xf32>
    %59 = vector.broadcast %56 : vector<1x8xf32> to vector<8x8xf32>
    %60 = arith.mulf %58, %59 : vector<8x8xf32>
    %61 = vector.broadcast %57 : vector<1x8xf32> to vector<8x8xf32>
    %62 = arith.addf %60, %61 : vector<8x8xf32>
    %cst_28 = arith.constant 0.000000e+00 : f32
    %63 = vector.broadcast %cst_28 : f32 to vector<8x8xf32>
    %64 = arith.maximumf %62, %63 : vector<8x8xf32>
    %c152 = arith.constant 152 : index
    %c0_29 = arith.constant 0 : index
    %65 = vector.load %arg2[%c152, %c0_29] : memref<176x128xf32, #tpu.memory_space<vmem>>, vector<8x4xf32>
    %c160 = arith.constant 160 : index
    %c0_30 = arith.constant 0 : index
    %66 = vector.load %arg2[%c160, %c0_30] : memref<176x128xf32, #tpu.memory_space<vmem>>, vector<1x4xf32>
    %cst_31 = arith.constant dense<0.000000e+00> : vector<8x4xf32>
    %67 = tpu.matmul %64, %65, %cst_31 {dimension_numbers = #tpu.dot_dimension_numbers<[1], [0], [0], [1], [0, 0, 1, 1], [], []>} : vector<8x8xf32>, vector<8x4xf32>, vector<8x4xf32> -> vector<8x4xf32>
    %68 = vector.broadcast %66 : vector<1x4xf32> to vector<8x4xf32>
    %69 = arith.addf %67, %68 : vector<8x4xf32>
    %cst_32 = arith.constant 0.000000e+00 : f32
    %70 = vector.broadcast %cst_32 : f32 to vector<8x4xf32>
    %71 = arith.maximumf %69, %70 : vector<8x4xf32>
    %c168 = arith.constant 168 : index
    %c0_33 = arith.constant 0 : index
    %72 = vector.load %arg2[%c168, %c0_33] : memref<176x128xf32, #tpu.memory_space<vmem>>, vector<4x1xf32>
    %c172 = arith.constant 172 : index
    %c0_34 = arith.constant 0 : index
    %73 = vector.load %arg2[%c172, %c0_34] : memref<176x128xf32, #tpu.memory_space<vmem>>, vector<1x1xf32>
    %cst_35 = arith.constant dense<0.000000e+00> : vector<8x1xf32>
    %74 = tpu.matmul %71, %72, %cst_35 {dimension_numbers = #tpu.dot_dimension_numbers<[1], [0], [0], [1], [0, 0, 1, 1], [], []>} : vector<8x4xf32>, vector<4x1xf32>, vector<8x1xf32> -> vector<8x1xf32>
    %75 = vector.broadcast %73 : vector<1x1xf32> to vector<8x1xf32>
    %76 = arith.addf %74, %75 : vector<8x1xf32>
    %77 = arith.negf %76 : vector<8x1xf32>
    %78 = math.exp %77 : vector<8x1xf32>
    %cst_36 = arith.constant 1.000000e+00 : f32
    %79 = vector.broadcast %cst_36 : f32 to vector<8x1xf32>
    %80 = arith.addf %79, %78 : vector<8x1xf32>
    %81 = arith.divf %79, %80 : vector<8x1xf32>
    %82 = arith.negf %31 : vector<8x1xf32>
    %83 = math.exp %82 : vector<8x1xf32>
    %cst_37 = arith.constant 1.000000e+00 : f32
    %84 = vector.broadcast %cst_37 : f32 to vector<8x1xf32>
    %85 = arith.addf %84, %83 : vector<8x1xf32>
    %86 = arith.divf %84, %85 : vector<8x1xf32>
    %cst_38 = arith.constant 1.000000e-07 : f32
    %cst_39 = arith.constant 0.99999988 : f32
    %87 = vector.broadcast %cst_38 : f32 to vector<8x1xf32>
    %88 = arith.maximumf %87, %86 : vector<8x1xf32>
    %89 = vector.broadcast %cst_39 : f32 to vector<8x1xf32>
    %90 = arith.minimumf %89, %88 : vector<8x1xf32>
    %91 = arith.mulf %90, %81 : vector<8x1xf32>
    %cst_40 = arith.constant 0.000000e+00 : f32
    %92 = vector.broadcast %cst_40 : f32 to vector<8x1xf32>
    %93 = arith.cmpf ogt, %2, %92 : vector<8x1xf32>
    %cst_41 = arith.constant 5.000000e-01 : f32
    %94 = vector.broadcast %cst_41 : f32 to vector<8x1xf32>
    %95 = arith.select %93, %91, %94 : vector<8x1xi1>, vector<8x1xf32>
    %96 = math.log %95 : vector<8x1xf32>
    %97 = arith.mulf %90, %96 : vector<8x1xf32>
    %cst_42 = arith.constant 1.000000e+00 : f32
    %98 = vector.broadcast %cst_42 : f32 to vector<8x1xf32>
    %99 = arith.subf %98, %90 : vector<8x1xf32>
    %cst_43 = arith.constant 1.000000e+00 : f32
    %100 = vector.broadcast %cst_43 : f32 to vector<8x1xf32>
    %101 = arith.subf %100, %95 : vector<8x1xf32>
    %102 = math.log %101 : vector<8x1xf32>
    %103 = arith.mulf %99, %102 : vector<8x1xf32>
    %104 = arith.addf %97, %103 : vector<8x1xf32>
    %cst_44 = arith.constant 0.000000e+00 : f32
    %105 = vector.broadcast %cst_44 : f32 to vector<8x1xf32>
    %106 = arith.subf %105, %104 : vector<8x1xf32>
    %cst_45 = arith.constant 0.000000e+00 : f32
    %107 = vector.broadcast %cst_45 : f32 to vector<8x1xf32>
    %108 = arith.select %93, %106, %107 : vector<8x1xi1>, vector<8x1xf32>
    %109 = arith.mulf %2, %90 : vector<8x1xf32>
    %cst_46 = arith.constant 1.000000e+00 : f32
    %110 = vector.broadcast %cst_46 : f32 to vector<8x1xf32>
    %111 = arith.subf %110, %2 : vector<8x1xf32>
    %112 = arith.mulf %111, %91 : vector<8x1xf32>
    %113 = arith.addf %109, %112 : vector<8x1xf32>
    %cst_47 = arith.constant 1.000000e+00 : f32
    %114 = vector.broadcast %cst_47 : f32 to vector<8x1xf32>
    %115 = arith.subf %114, %113 : vector<8x1xf32>
    %cst_48 = arith.constant 1.000000e-07 : f32
    %116 = vector.broadcast %cst_48 : f32 to vector<8x1xf32>
    %117 = arith.addf %115, %116 : vector<8x1xf32>
    %118 = arith.divf %113, %117 : vector<8x1xf32>
    %119 = math.log %118 : vector<8x1xf32>
    %cst_49 = arith.constant 0.000000e+00 : f32
    %120 = vector.broadcast %cst_49 : f32 to vector<8x123xf32>
    %121 = tpu.concatenate %119, %31, %108, %2, %55, %120 in 1 : vector<8x1xf32>, vector<8x1xf32>, vector<8x1xf32>, vector<8x1xf32>, vector<8x1xf32>, vector<8x123xf32> -> vector<8x128xf32>
    %c0_50 = arith.constant 0 : index
    %c0_51 = arith.constant 0 : index
    %122 = vector.load %arg3[%c0_50, %c0_51] : memref<8x128xf32, #tpu.memory_space<vmem>>, vector<8x128xf32>
    tpu.vector_store %arg3[%c0_50, %c0_51], %121 {strides = array<i32>} : memref<8x128xf32, #tpu.memory_space<vmem>>, vector<8x128xf32>,
    return
  }
  func.func @transform_0(%arg0: i32) -> (i32, i32) {
    %c0_i32 = arith.constant 0 : i32
    %c0_i32_0 = arith.constant 0 : i32
    return %arg0, %c0_i32 : i32, i32
  }
  func.func @transform_1(%arg0: i32) -> (i32, i32) {
    %c0_i32 = arith.constant 0 : i32
    %c0_i32_0 = arith.constant 0 : i32
    %c0_i32_1 = arith.constant 0 : i32
    return %c0_i32, %c0_i32_0 : i32, i32
  }
  func.func @transform_2(%arg0: i32) -> (i32, i32) {
    %c0_i32 = arith.constant 0 : i32
    %c0_i32_0 = arith.constant 0 : i32
    return %arg0, %c0_i32 : i32, i32
  }
}

</mosaic_0001>

<llo_original>
// kernel: tpu_custom_call.1
$region0: #{tpu_custom_call.1}
  #allocation0 [shape = 'u32[]', space=smem, size = 0x4, offset = 0x4, fixed_abs, tag = 'smem constant byte address 0x4 - core index']
  #allocation1 [shape = 'u32[144,128]{1,0:T(1,128)}', space=vmem, size = 0x12000, scoped, tag = 'internal scratch']
  %s0 = inlined_call_operand.hbm [shape: f32[8,40], index: 0, kind: input, shape index: {}]
  %s1 = inlined_call_operand.hbm [shape: f32[176,128], index: 1, kind: input, shape index: {}]
  %s2 = inlined_call_operand.hbm [shape: f32[8,128], index: 2, kind: output, shape index: {}]
  %s3 = sld [smem:[#allocation0]]
  $region26: #{tpu_custom_call.1} parent=0
    _
  %s5 = ssub.s32 1, %s3
  %s6 = scalar_select 0, %s5, %s3
  $region1: #{tpu_custom_call.1} parent=0
    #allocation2 [shape = 'u8[4096]{0}', space=vmem, size = 0x1000, scoped, tag = 'input window, operand 0, single buffered']
    #allocation3 [shape = 's32[1]{0}', space=sflag, size = 0x4, scoped, tag = 'scoped memory for tpu_custom_call.1']
    #allocation4 [shape = 's32[1]{0}', space=sflag, size = 0x4, scoped, tag = 'scoped memory for tpu_custom_call.1']
    #allocation5 [shape = 'u8[90112]{0}', space=vmem, size = 0x16000, scoped, tag = 'input window, operand 1, single buffered']
    #allocation6 [shape = 's32[1]{0}', space=sflag, size = 0x4, scoped, tag = 'scoped memory for tpu_custom_call.1']
    #allocation7 [shape = 'u8[4096]{0}', space=vmem, size = 0x1000, scoped, tag = 'output window, operand 0, single buffered']
    %7 = vsyncpa [#allocation3], 0
    %8 = vsyncpa [#allocation6], 0
    %9 = vsyncpa [#allocation4], 0
    // Predicated region
    $region2: #{tpu_custom_call.1} parent=1 // pred_check
      _
    $region3: #{tpu_custom_call.1} parent=1 // pred_check_branch
      %11 = sbr.rel (0) target = $region5
    $region4: #{tpu_custom_call.1} parent=1 // pred_region
      %s13 = ssub.s32 128, 128
      %14 = vsyncadd [#allocation3], %s13
      %s16 = sshll.u32 [#allocation2], 4
      %s17 = int_to_ptr.vmem [resolvable:$true] %s16
      %19 = dma.hbm_to_vmem [thread:$0]  %s0, 128, %s17, [#allocation3]
    $region5: #{tpu_custom_call.1} parent=1 // pred_fallthru
      _
    // Predicated region
    $region6: #{tpu_custom_call.1} parent=1 // pred_check
      _
    $region7: #{tpu_custom_call.1} parent=1 // pred_check_branch
      %21 = sbr.rel (0) target = $region9
    $region8: #{tpu_custom_call.1} parent=1 // pred_region
      %s23 = ssub.s32 2816, 2816
      %24 = vsyncadd [#allocation6], %s23
      %s25 = sshll.u32 [#allocation5], 4
      %s26 = int_to_ptr.vmem [resolvable:$true] %s25
      %31 = dma.hbm_to_vmem [thread:$0]  %s1, 2816, %s26, [#allocation6], 128, 128, 8
    $region9: #{tpu_custom_call.1} parent=1 // pred_fallthru
      _
    // Predicated region
    $region10: #{tpu_custom_call.1} parent=1 // pred_check
      _
    $region11: #{tpu_custom_call.1} parent=1 // pred_check_branch
      %33 = sbr.rel (0) target = $region13
    $region12: #{tpu_custom_call.1} parent=1 // pred_region
      %34 = dma.done [#allocation3], 128
    $region13: #{tpu_custom_call.1} parent=1 // pred_fallthru
      _
    // Predicated region
    $region14: #{tpu_custom_call.1} parent=1 // pred_check
      _
    $region15: #{tpu_custom_call.1} parent=1 // pred_check_branch
      %36 = sbr.rel (0) target = $region17
    $region16: #{tpu_custom_call.1} parent=1 // pred_region
      %37 = dma.done [#allocation6], 2816
    $region17: #{tpu_custom_call.1} parent=1 // pred_fallthru
      _
    %v38 = vld [vmem:[#allocation2] sm:$0xff]
    %v39 = vld [vmem:[#allocation5] sm:$0xff]
    %v40 = vld [vmem:[#allocation5 + $0x8] sm:$0xff]
    %v41 = vld [vmem:[#allocation5 + $0x10] sm:$0xff]
    %v42 = vld [vmem:[#allocation5 + $0x18] sm:$0xff]
    %v43 = vld [vmem:[#allocation5 + $0x20] sm:$0xff]
    %v44 = vld [vmem:[#allocation5 + $0x28] sm:$0x1]
    %v45 = vlaneseq
    %v46 = vshrl.u32 %v45, 7
    %v47 = vsub.s32 0, %v46
    %v48 = vrot.slane %v44, %v47
    %vm49 = vcmask 326656
    %v51 = vsel %vm49, %v38, 0
    %53 = vmatprep.subr.mxu0 0.0
    %54 = vmatpush1.msra.mxu0 0.0
    %55 = vmatprep.subr.mxu0 0.0
    %56 = vmatpush1.msra.mxu0 0.0
    %57 = vmatprep.subr.mxu0 0.0
    %58 = vmatpush1.msra.mxu0 0.0
    %59 = vmatprep.subr.mxu0 0.0
    %60 = vmatpush1.msra.mxu0 0.0
    %61 = vmatprep.subr.mxu0 0.0
    %62 = vmatpush1.msra.mxu0 0.0
    %63 = vmatprep.subr.mxu0 0.0
    %64 = vmatpush1.msra.mxu0 0.0
    %65 = vmatprep.subr.mxu0 0.0
    %66 = vmatpush1.msra.mxu0 0.0
    %67 = vmatprep.subr.mxu0 0.0
    %68 = vmatpush1.msra.mxu0 0.0
    %69 = vmatprep.subr.mxu0 0.0
    %70 = vmatpush1.msra.mxu0 0.0
    %71 = vmatprep.subr.mxu0 0.0
    %72 = vmatpush1.msra.mxu0 0.0
    %73 = vmatprep.subr.mxu0 0.0
    %74 = vmatpush1.msra.mxu0 0.0
    %75 = vmatprep.subr.mxu0 0.0
    %76 = vmatpush1.msra.mxu0 %v43
    %77 = vmatprep.subr.mxu0 0.0
    %78 = vmatpush1.msra.mxu0 %v42
    %79 = vmatprep.subr.mxu0 0.0
    %80 = vmatpush1.msra.mxu0 %v41
    %81 = vmatprep.subr.mxu0 0.0
    %82 = vmatpush1.msra.mxu0 %v40
    %83 = vmatprep.subr.mxu0 0.0
    %84 = vmatpush1.msra.mxu0 %v39
    %85 = vmatprep.subr.mxu0 0.0
    %86 = vmatpush2.msra.mxu0 0.0
    %87 = vmatprep.subr.mxu0 0.0
    %88 = vmatpush2.msra.mxu0 0.0
    %89 = vmatprep.subr.mxu0 0.0
    %90 = vmatpush2.msra.mxu0 0.0
    %91 = vmatprep.subr.mxu0 0.0
    %92 = vmatpush2.msra.mxu0 0.0
    %93 = vmatprep.subr.mxu0 0.0
    %94 = vmatpush2.msra.mxu0 0.0
    %95 = vmatprep.subr.mxu0 0.0
    %96 = vmatpush2.msra.mxu0 0.0
    %97 = vmatprep.subr.mxu0 0.0
    %98 = vmatpush2.msra.mxu0 0.0
    %99 = vmatprep.subr.mxu0 0.0
    %100 = vmatpush2.msra.mxu0 0.0
    %101 = vmatprep.subr.mxu0 0.0
    %102 = vmatpush2.msra.mxu0 0.0
    %103 = vmatprep.subr.mxu0 0.0
    %104 = vmatpush2.msra.mxu0 0.0
    %105 = vmatprep.subr.mxu0 0.0
    %106 = vmatpush2.msra.mxu0 0.0
    %107 = vmatprep.subr.mxu0 0.0
    %108 = vmatpush2.msra.mxu0 0.0
    %109 = vmatprep.subr.mxu0 0.0
    %110 = vmatpush2.msra.mxu0 0.0
    %111 = vmatprep.subr.mxu0 0.0
    %112 = vmatpush2.msra.mxu0 0.0
    %113 = vmatprep.subr.mxu0 0.0
    %114 = vmatpush2.msra.mxu0 0.0
    %115 = vmatprep.subr.mxu0 0.0
    %116 = vmatpush2.msra.mxu0 0.0
    %117 = vmatprep.mubr.f32.mxu0 0.0
    %118 = vmatmul.mubr.f32.gmra.mxu0 %v51
    %v119 = vpop.f32.mrf.mxu0
    %v120 = vadd.f32 %v48, %v119
    %v121 = vpop.f32.mrf.mxu0
    %122 = vdwg.mxu0
    %v123 = vmax.f32 %v120, 0.0
    %v124 = vld [vmem:[#allocation5 + $0x30] sm:$0xff]
    %v125 = vld [vmem:[#allocation5 + $0x38] sm:$0xff]
    %v126 = vld [vmem:[#allocation5 + $0x40] sm:$0xff]
    %v127 = vld [vmem:[#allocation5 + $0x48] sm:$0xff]
    %v128 = vld [vmem:[#allocation5 + $0x50] sm:$0x1]
    %v129 = vlaneseq
    %v130 = vshrl.u32 %v129, 7
    %v131 = vsub.s32 0, %v130
    %v132 = vrot.slane %v128, %v131
    %vm133 = vcmask 261120
    %v135 = vsel %vm133, %v123, 0
    %137 = vmatprep.subr.mxu0 0.0
    %138 = vmatpush1.msra.mxu0 0.0
    %139 = vmatprep.subr.mxu0 0.0
    %140 = vmatpush1.msra.mxu0 0.0
    %141 = vmatprep.subr.mxu0 0.0
    %142 = vmatpush1.msra.mxu0 0.0
    %143 = vmatprep.subr.mxu0 0.0
    %144 = vmatpush1.msra.mxu0 0.0
    %145 = vmatprep.subr.mxu0 0.0
    %146 = vmatpush1.msra.mxu0 0.0
    %147 = vmatprep.subr.mxu0 0.0
    %148 = vmatpush1.msra.mxu0 0.0
    %149 = vmatprep.subr.mxu0 0.0
    %150 = vmatpush1.msra.mxu0 0.0
    %151 = vmatprep.subr.mxu0 0.0
    %152 = vmatpush1.msra.mxu0 0.0
    %153 = vmatprep.subr.mxu0 0.0
    %154 = vmatpush1.msra.mxu0 0.0
    %155 = vmatprep.subr.mxu0 0.0
    %156 = vmatpush1.msra.mxu0 0.0
    %157 = vmatprep.subr.mxu0 0.0
    %158 = vmatpush1.msra.mxu0 0.0
    %159 = vmatprep.subr.mxu0 0.0
    %160 = vmatpush1.msra.mxu0 0.0
    %161 = vmatprep.subr.mxu0 0.0
    %162 = vmatpush1.msra.mxu0 %v127
    %163 = vmatprep.subr.mxu0 0.0
    %164 = vmatpush1.msra.mxu0 %v126
    %165 = vmatprep.subr.mxu0 0.0
    %166 = vmatpush1.msra.mxu0 %v125
    %167 = vmatprep.subr.mxu0 0.0
    %168 = vmatpush1.msra.mxu0 %v124
    %169 = vmatprep.subr.mxu0 0.0
    %170 = vmatpush2.msra.mxu0 0.0
    %171 = vmatprep.subr.mxu0 0.0
    %172 = vmatpush2.msra.mxu0 0.0
    %173 = vmatprep.subr.mxu0 0.0
    %174 = vmatpush2.msra.mxu0 0.0
    %175 = vmatprep.subr.mxu0 0.0
    %176 = vmatpush2.msra.mxu0 0.0
    %177 = vmatprep.subr.mxu0 0.0
    %178 = vmatpush2.msra.mxu0 0.0
    %179 = vmatprep.subr.mxu0 0.0
    %180 = vmatpush2.msra.mxu0 0.0
    %181 = vmatprep.subr.mxu0 0.0
    %182 = vmatpush2.msra.mxu0 0.0
    %183 = vmatprep.subr.mxu0 0.0
    %184 = vmatpush2.msra.mxu0 0.0
    %185 = vmatprep.subr.mxu0 0.0
    %186 = vmatpush2.msra.mxu0 0.0
    %187 = vmatprep.subr.mxu0 0.0
    %188 = vmatpush2.msra.mxu0 0.0
    %189 = vmatprep.subr.mxu0 0.0
    %190 = vmatpush2.msra.mxu0 0.0
    %191 = vmatprep.subr.mxu0 0.0
    %192 = vmatpush2.msra.mxu0 0.0
    %193 = vmatprep.subr.mxu0 0.0
    %194 = vmatpush2.msra.mxu0 0.0
    %195 = vmatprep.subr.mxu0 0.0
    %196 = vmatpush2.msra.mxu0 0.0
    %197 = vmatprep.subr.mxu0 0.0
    %198 = vmatpush2.msra.mxu0 0.0
    %199 = vmatprep.subr.mxu0 0.0
    %200 = vmatpush2.msra.mxu0 0.0
    %201 = vmatprep.mubr.f32.mxu0 0.0
    %202 = vmatmul.mubr.f32.gmra.mxu0 %v135
    %v203 = vpop.f32.mrf.mxu0
    %v204 = vadd.f32 %v132, %v203
    %v205 = vpop.f32.mrf.mxu0
    %206 = vdwg.mxu0
    %v207 = vmax.f32 %v204, 0.0
    %v208 = vld [vmem:[#allocation5 + $0x58] sm:$0xff]
    %v209 = vld [vmem:[#allocation5 + $0x60] sm:$0xff]
    %v210 = vld [vmem:[#allocation5 + $0x68] sm:$0x1]
    %v211 = vlaneseq
    %v212 = vshrl.u32 %v211, 7
    %v213 = vsub.s32 0, %v212
    %v214 = vrot.slane %v210, %v213
    %vm215 = vcmask 130048
    %v217 = vsel %vm215, %v207, 0
    %219 = vmatprep.subr.mxu0 0.0
    %220 = vmatpush1.msra.mxu0 0.0
    %221 = vmatprep.subr.mxu0 0.0
    %222 = vmatpush1.msra.mxu0 0.0
    %223 = vmatprep.subr.mxu0 0.0
    %224 = vmatpush1.msra.mxu0 0.0
    %225 = vmatprep.subr.mxu0 0.0
    %226 = vmatpush1.msra.mxu0 0.0
    %227 = vmatprep.subr.mxu0 0.0
    %228 = vmatpush1.msra.mxu0 0.0
    %229 = vmatprep.subr.mxu0 0.0
    %230 = vmatpush1.msra.mxu0 0.0
    %231 = vmatprep.subr.mxu0 0.0
    %232 = vmatpush1.msra.mxu0 0.0
    %233 = vmatprep.subr.mxu0 0.0
    %234 = vmatpush1.msra.mxu0 0.0
    %235 = vmatprep.subr.mxu0 0.0
    %236 = vmatpush1.msra.mxu0 0.0
    %237 = vmatprep.subr.mxu0 0.0
    %238 = vmatpush1.msra.mxu0 0.0
    %239 = vmatprep.subr.mxu0 0.0
    %240 = vmatpush1.msra.mxu0 0.0
    %241 = vmatprep.subr.mxu0 0.0
    %242 = vmatpush1.msra.mxu0 0.0
    %243 = vmatprep.subr.mxu0 0.0
    %244 = vmatpush1.msra.mxu0 0.0
    %245 = vmatprep.subr.mxu0 0.0
    %246 = vmatpush1.msra.mxu0 0.0
    %247 = vmatprep.subr.mxu0 0.0
    %248 = vmatpush1.msra.mxu0 %v209
    %249 = vmatprep.subr.mxu0 0.0
    %250 = vmatpush1.msra.mxu0 %v208
    %251 = vmatprep.subr.mxu0 0.0
    %252 = vmatpush2.msra.mxu0 0.0
    %253 = vmatprep.subr.mxu0 0.0
    %254 = vmatpush2.msra.mxu0 0.0
    %255 = vmatprep.subr.mxu0 0.0
    %256 = vmatpush2.msra.mxu0 0.0
    %257 = vmatprep.subr.mxu0 0.0
    %258 = vmatpush2.msra.mxu0 0.0
    %259 = vmatprep.subr.mxu0 0.0
    %260 = vmatpush2.msra.mxu0 0.0
    %261 = vmatprep.subr.mxu0 0.0
    %262 = vmatpush2.msra.mxu0 0.0
    %263 = vmatprep.subr.mxu0 0.0
    %264 = vmatpush2.msra.mxu0 0.0
    %265 = vmatprep.subr.mxu0 0.0
    %266 = vmatpush2.msra.mxu0 0.0
    %267 = vmatprep.subr.mxu0 0.0
    %268 = vmatpush2.msra.mxu0 0.0
    %269 = vmatprep.subr.mxu0 0.0
    %270 = vmatpush2.msra.mxu0 0.0
    %271 = vmatprep.subr.mxu0 0.0
    %272 = vmatpush2.msra.mxu0 0.0
    %273 = vmatprep.subr.mxu0 0.0
    %274 = vmatpush2.msra.mxu0 0.0
    %275 = vmatprep.subr.mxu0 0.0
    %276 = vmatpush2.msra.mxu0 0.0
    %277 = vmatprep.subr.mxu0 0.0
    %278 = vmatpush2.msra.mxu0 0.0
    %279 = vmatprep.subr.mxu0 0.0
    %280 = vmatpush2.msra.mxu0 0.0
    %281 = vmatprep.subr.mxu0 0.0
    %282 = vmatpush2.msra.mxu0 0.0
    %283 = vmatprep.mubr.f32.mxu0 0.0
    %284 = vmatmul.mubr.f32.gmra.mxu0 %v217
    %v285 = vpop.f32.mrf.mxu0
    %v286 = vadd.f32 %v214, %v285
    %v287 = vpop.f32.mrf.mxu0
    %288 = vdwg.mxu0
    %v289 = vmax.f32 %v286, 0.0
    %v290 = vld [vmem:[#allocation5 + $0x70] sm:$0xf]
    %v291 = vld [vmem:[#allocation5 + $0x74] sm:$0x1]
    %v292 = vlaneseq
    %v293 = vshrl.u32 %v292, 7
    %v294 = vsub.s32 0, %v293
    %v295 = vrot.slane %v291, %v294
    %vm296 = vcmask 31744
    %v298 = vsel %vm296, %v289, 0
    %vm300 = vcmask 1043456
    %v302 = vsel %vm300, %v290, 0
    %304 = vmatprep.subr.mxu0 0.0
    %305 = vmatpush1.msra.mxu0 0.0
    %306 = vmatprep.subr.mxu0 0.0
    %307 = vmatpush1.msra.mxu0 0.0
    %308 = vmatprep.subr.mxu0 0.0
    %309 = vmatpush1.msra.mxu0 0.0
    %310 = vmatprep.subr.mxu0 0.0
    %311 = vmatpush1.msra.mxu0 0.0
    %312 = vmatprep.subr.mxu0 0.0
    %313 = vmatpush1.msra.mxu0 0.0
    %314 = vmatprep.subr.mxu0 0.0
    %315 = vmatpush1.msra.mxu0 0.0
    %316 = vmatprep.subr.mxu0 0.0
    %317 = vmatpush1.msra.mxu0 0.0
    %318 = vmatprep.subr.mxu0 0.0
    %319 = vmatpush1.msra.mxu0 0.0
    %320 = vmatprep.subr.mxu0 0.0
    %321 = vmatpush1.msra.mxu0 0.0
    %322 = vmatprep.subr.mxu0 0.0
    %323 = vmatpush1.msra.mxu0 0.0
    %324 = vmatprep.subr.mxu0 0.0
    %325 = vmatpush1.msra.mxu0 0.0
    %326 = vmatprep.subr.mxu0 0.0
    %327 = vmatpush1.msra.mxu0 0.0
    %328 = vmatprep.subr.mxu0 0.0
    %329 = vmatpush1.msra.mxu0 0.0
    %330 = vmatprep.subr.mxu0 0.0
    %331 = vmatpush1.msra.mxu0 0.0
    %332 = vmatprep.subr.mxu0 0.0
    %333 = vmatpush1.msra.mxu0 0.0
    %334 = vmatprep.subr.mxu0 0.0
    %335 = vmatpush1.msra.mxu0 %v302
    %336 = vmatprep.subr.mxu0 0.0
    %337 = vmatpush2.msra.mxu0 0.0
    %338 = vmatprep.subr.mxu0 0.0
    %339 = vmatpush2.msra.mxu0 0.0
    %340 = vmatprep.subr.mxu0 0.0
    %341 = vmatpush2.msra.mxu0 0.0
    %342 = vmatprep.subr.mxu0 0.0
    %343 = vmatpush2.msra.mxu0 0.0
    %344 = vmatprep.subr.mxu0 0.0
    %345 = vmatpush2.msra.mxu0 0.0
    %346 = vmatprep.subr.mxu0 0.0
    %347 = vmatpush2.msra.mxu0 0.0
    %348 = vmatprep.subr.mxu0 0.0
    %349 = vmatpush2.msra.mxu0 0.0
    %350 = vmatprep.subr.mxu0 0.0
    %351 = vmatpush2.msra.mxu0 0.0
    %352 = vmatprep.subr.mxu0 0.0
    %353 = vmatpush2.msra.mxu0 0.0
    %354 = vmatprep.subr.mxu0 0.0
    %355 = vmatpush2.msra.mxu0 0.0
    %356 = vmatprep.subr.mxu0 0.0
    %357 = vmatpush2.msra.mxu0 0.0
    %358 = vmatprep.subr.mxu0 0.0
    %359 = vmatpush2.msra.mxu0 0.0
    %360 = vmatprep.subr.mxu0 0.0
    %361 = vmatpush2.msra.mxu0 0.0
    %362 = vmatprep.subr.mxu0 0.0
    %363 = vmatpush2.msra.mxu0 0.0
    %364 = vmatprep.subr.mxu0 0.0
    %365 = vmatpush2.msra.mxu0 0.0
    %366 = vmatprep.subr.mxu0 0.0
    %367 = vmatpush2.msra.mxu0 0.0
    %368 = vmatprep.mubr.f32.mxu0 0.0
    %369 = vmatmul.mubr.f32.gmra.mxu0 %v298
    %v370 = vpop.f32.mrf.mxu0
    %v371 = vadd.f32 %v295, %v370
    %v372 = vpop.f32.mrf.mxu0
    %373 = vdwg.mxu0
    %v374 = vsub.f32 %v38, 40.0
    %v375 = vmul.f32 %v374, 0.033333335
    %v376 = vld [vmem:[#allocation5 + $0x78] sm:$0xff]
    %v377 = vld [vmem:[#allocation5 + $0x80] sm:$0x1]
    %v378 = vlaneseq
    %v379 = vshrl.u32 %v378, 7
    %v380 = vsub.s32 0, %v379
    %v381 = vrot.slane %v377, %v380
    %382 = vrot.lane.b32.xlu0 %v289, 124
    %v383 = vpop.permute.xlu0 %382
    %vm384 = vcmask 64512
    %v385 = vsel %vm384, %v383, 0
    %387 = vmatprep.subr.mxu0 0.0
    %388 = vmatpush1.msra.mxu0 0.0
    %389 = vmatprep.subr.mxu0 0.0
    %390 = vmatpush1.msra.mxu0 0.0
    %391 = vmatprep.subr.mxu0 0.0
    %392 = vmatpush1.msra.mxu0 0.0
    %393 = vmatprep.subr.mxu0 0.0
    %394 = vmatpush1.msra.mxu0 0.0
    %395 = vmatprep.subr.mxu0 0.0
    %396 = vmatpush1.msra.mxu0 0.0
    %397 = vmatprep.subr.mxu0 0.0
    %398 = vmatpush1.msra.mxu0 0.0
    %399 = vmatprep.subr.mxu0 0.0
    %400 = vmatpush1.msra.mxu0 0.0
    %401 = vmatprep.subr.mxu0 0.0
    %402 = vmatpush1.msra.mxu0 0.0
    %403 = vmatprep.subr.mxu0 0.0
    %404 = vmatpush1.msra.mxu0 0.0
    %405 = vmatprep.subr.mxu0 0.0
    %406 = vmatpush1.msra.mxu0 0.0
    %407 = vmatprep.subr.mxu0 0.0
    %408 = vmatpush1.msra.mxu0 0.0
    %409 = vmatprep.subr.mxu0 0.0
    %410 = vmatpush1.msra.mxu0 0.0
    %411 = vmatprep.subr.mxu0 0.0
    %412 = vmatpush1.msra.mxu0 0.0
    %413 = vmatprep.subr.mxu0 0.0
    %414 = vmatpush1.msra.mxu0 0.0
    %415 = vmatprep.subr.mxu0 0.0
    %416 = vmatpush1.msra.mxu0 0.0
    %417 = vmatprep.subr.mxu0 0.0
    %418 = vmatpush1.msra.mxu0 %v376
    %419 = vmatprep.subr.mxu0 0.0
    %420 = vmatpush2.msra.mxu0 0.0
    %421 = vmatprep.subr.mxu0 0.0
    %422 = vmatpush2.msra.mxu0 0.0
    %423 = vmatprep.subr.mxu0 0.0
    %424 = vmatpush2.msra.mxu0 0.0
    %425 = vmatprep.subr.mxu0 0.0
    %426 = vmatpush2.msra.mxu0 0.0
    %427 = vmatprep.subr.mxu0 0.0
    %428 = vmatpush2.msra.mxu0 0.0
    %429 = vmatprep.subr.mxu0 0.0
    %430 = vmatpush2.msra.mxu0 0.0
    %431 = vmatprep.subr.mxu0 0.0
    %432 = vmatpush2.msra.mxu0 0.0
    %433 = vmatprep.subr.mxu0 0.0
    %434 = vmatpush2.msra.mxu0 0.0
    %435 = vmatprep.subr.mxu0 0.0
    %436 = vmatpush2.msra.mxu0 0.0
    %437 = vmatprep.subr.mxu0 0.0
    %438 = vmatpush2.msra.mxu0 0.0
    %439 = vmatprep.subr.mxu0 0.0
    %440 = vmatpush2.msra.mxu0 0.0
    %441 = vmatprep.subr.mxu0 0.0
    %442 = vmatpush2.msra.mxu0 0.0
    %443 = vmatprep.subr.mxu0 0.0
    %444 = vmatpush2.msra.mxu0 0.0
    %445 = vmatprep.subr.mxu0 0.0
    %446 = vmatpush2.msra.mxu0 0.0
    %447 = vmatprep.subr.mxu0 0.0
    %448 = vmatpush2.msra.mxu0 0.0
    %449 = vmatprep.subr.mxu0 0.0
    %450 = vmatpush2.msra.mxu0 0.0
    %451 = vmatprep.mubr.f32.mxu0 0.0
    %452 = vmatmul.mubr.f32.gmra.mxu0 %v385
    %v453 = vpop.f32.mrf.mxu0
    %v454 = vadd.f32 %v381, %v453
    %v455 = vpop.f32.mrf.mxu0
    %456 = vdwg.mxu0
    %v457 = vmax.f32 %v454, 0.0
    %v458 = vld [vmem:[#allocation5 + $0x88] sm:$0xf]
    %v459 = vld [vmem:[#allocation5 + $0x8c] sm:$0x1]
    %v460 = vlaneseq
    %v461 = vshrl.u32 %v460, 7
    %v462 = vsub.s32 0, %v461
    %v463 = vrot.slane %v459, %v462
    %v465 = vsel %vm296, %v457, 0
    %v468 = vsel %vm300, %v458, 0
    %470 = vmatprep.subr.mxu0 0.0
    %471 = vmatpush1.msra.mxu0 0.0
    %472 = vmatprep.subr.mxu0 0.0
    %473 = vmatpush1.msra.mxu0 0.0
    %474 = vmatprep.subr.mxu0 0.0
    %475 = vmatpush1.msra.mxu0 0.0
    %476 = vmatprep.subr.mxu0 0.0
    %477 = vmatpush1.msra.mxu0 0.0
    %478 = vmatprep.subr.mxu0 0.0
    %479 = vmatpush1.msra.mxu0 0.0
    %480 = vmatprep.subr.mxu0 0.0
    %481 = vmatpush1.msra.mxu0 0.0
    %482 = vmatprep.subr.mxu0 0.0
    %483 = vmatpush1.msra.mxu0 0.0
    %484 = vmatprep.subr.mxu0 0.0
    %485 = vmatpush1.msra.mxu0 0.0
    %486 = vmatprep.subr.mxu0 0.0
    %487 = vmatpush1.msra.mxu0 0.0
    %488 = vmatprep.subr.mxu0 0.0
    %489 = vmatpush1.msra.mxu0 0.0
    %490 = vmatprep.subr.mxu0 0.0
    %491 = vmatpush1.msra.mxu0 0.0
    %492 = vmatprep.subr.mxu0 0.0
    %493 = vmatpush1.msra.mxu0 0.0
    %494 = vmatprep.subr.mxu0 0.0
    %495 = vmatpush1.msra.mxu0 0.0
    %496 = vmatprep.subr.mxu0 0.0
    %497 = vmatpush1.msra.mxu0 0.0
    %498 = vmatprep.subr.mxu0 0.0
    %499 = vmatpush1.msra.mxu0 0.0
    %500 = vmatprep.subr.mxu0 0.0
    %501 = vmatpush1.msra.mxu0 %v468
    %502 = vmatprep.subr.mxu0 0.0
    %503 = vmatpush2.msra.mxu0 0.0
    %504 = vmatprep.subr.mxu0 0.0
    %505 = vmatpush2.msra.mxu0 0.0
    %506 = vmatprep.subr.mxu0 0.0
    %507 = vmatpush2.msra.mxu0 0.0
    %508 = vmatprep.subr.mxu0 0.0
    %509 = vmatpush2.msra.mxu0 0.0
    %510 = vmatprep.subr.mxu0 0.0
    %511 = vmatpush2.msra.mxu0 0.0
    %512 = vmatprep.subr.mxu0 0.0
    %513 = vmatpush2.msra.mxu0 0.0
    %514 = vmatprep.subr.mxu0 0.0
    %515 = vmatpush2.msra.mxu0 0.0
    %516 = vmatprep.subr.mxu0 0.0
    %517 = vmatpush2.msra.mxu0 0.0
    %518 = vmatprep.subr.mxu0 0.0
    %519 = vmatpush2.msra.mxu0 0.0
    %520 = vmatprep.subr.mxu0 0.0
    %521 = vmatpush2.msra.mxu0 0.0
    %522 = vmatprep.subr.mxu0 0.0
    %523 = vmatpush2.msra.mxu0 0.0
    %524 = vmatprep.subr.mxu0 0.0
    %525 = vmatpush2.msra.mxu0 0.0
    %526 = vmatprep.subr.mxu0 0.0
    %527 = vmatpush2.msra.mxu0 0.0
    %528 = vmatprep.subr.mxu0 0.0
    %529 = vmatpush2.msra.mxu0 0.0
    %530 = vmatprep.subr.mxu0 0.0
    %531 = vmatpush2.msra.mxu0 0.0
    %532 = vmatprep.subr.mxu0 0.0
    %533 = vmatpush2.msra.mxu0 0.0
    %534 = vmatprep.mubr.f32.mxu0 0.0
    %535 = vmatmul.mubr.f32.gmra.mxu0 %v465
    %v536 = vpop.f32.mrf.mxu0
    %v537 = vadd.f32 %v463, %v536
    %v538 = vpop.f32.mrf.mxu0
    %539 = vdwg.mxu0
    %v540 = vxor.u32 %v537, 2147483648
    %v541 = vmul.f32 %v540, 1.442695
    %v542 = vpow.pop %v541
    %v543 = vadd.f32 %v542, 1.0
    %v544 = vrcp.pop %v543
    %v545 = vmul.f32 1.0, %v544
    %547 = vrot.lane.b32.xlu0 %v375, 96
    %v548 = vpop.permute.xlu0 %547
    %v550 = vsub.f32 %v545, %v548
    %v551 = vand.u32 2147483647, %v550
    %552 = vrot.lane.b32.xlu0 %v38, 94
    %v553 = vpop.permute.xlu0 %552
    %v555 = vmul.f32 %v551, %v553
    %v556 = vld [vmem:[#allocation5 + $0x90] sm:$0x1]
    %v557 = vld [vmem:[#allocation5 + $0x91] sm:$0x1]
    %558 = vset.pattern.permute.xlu0 32
    %559 = vperm.xlu0 %558, %v375
    %v560 = vpop.permute.xlu0 %559
    %v562 = vlaneseq
    %v563 = vshrl.u32 %v562, 7
    %v564 = vsub.s32 0, %v563
    %v565 = vrot.slane %v556, %v564
    %v566 = vmul.f32 %v560, %v565
    %v567 = vlaneseq
    %v568 = vshrl.u32 %v567, 7
    %v569 = vsub.s32 0, %v568
    %v570 = vrot.slane %v557, %v569
    %v571 = vadd.f32 %v566, %v570
    %v572 = vmax.f32 %v571, 0.0
    %v573 = vld [vmem:[#allocation5 + $0x98] sm:$0xff]
    %v574 = vld [vmem:[#allocation5 + $0xa0] sm:$0x1]
    %v575 = vlaneseq
    %v576 = vshrl.u32 %v575, 7
    %v577 = vsub.s32 0, %v576
    %v578 = vrot.slane %v574, %v577
    %v580 = vsel %vm384, %v572, 0
    %582 = vmatprep.subr.mxu0 0.0
    %583 = vmatpush1.msra.mxu0 0.0
    %584 = vmatprep.subr.mxu0 0.0
    %585 = vmatpush1.msra.mxu0 0.0
    %586 = vmatprep.subr.mxu0 0.0
    %587 = vmatpush1.msra.mxu0 0.0
    %588 = vmatprep.subr.mxu0 0.0
    %589 = vmatpush1.msra.mxu0 0.0
    %590 = vmatprep.subr.mxu0 0.0
    %591 = vmatpush1.msra.mxu0 0.0
    %592 = vmatprep.subr.mxu0 0.0
    %593 = vmatpush1.msra.mxu0 0.0
    %594 = vmatprep.subr.mxu0 0.0
    %595 = vmatpush1.msra.mxu0 0.0
    %596 = vmatprep.subr.mxu0 0.0
    %597 = vmatpush1.msra.mxu0 0.0
    %598 = vmatprep.subr.mxu0 0.0
    %599 = vmatpush1.msra.mxu0 0.0
    %600 = vmatprep.subr.mxu0 0.0
    %601 = vmatpush1.msra.mxu0 0.0
    %602 = vmatprep.subr.mxu0 0.0
    %603 = vmatpush1.msra.mxu0 0.0
    %604 = vmatprep.subr.mxu0 0.0
    %605 = vmatpush1.msra.mxu0 0.0
    %606 = vmatprep.subr.mxu0 0.0
    %607 = vmatpush1.msra.mxu0 0.0
    %608 = vmatprep.subr.mxu0 0.0
    %609 = vmatpush1.msra.mxu0 0.0
    %610 = vmatprep.subr.mxu0 0.0
    %611 = vmatpush1.msra.mxu0 0.0
    %612 = vmatprep.subr.mxu0 0.0
    %613 = vmatpush1.msra.mxu0 %v573
    %614 = vmatprep.subr.mxu0 0.0
    %615 = vmatpush2.msra.mxu0 0.0
    %616 = vmatprep.subr.mxu0 0.0
    %617 = vmatpush2.msra.mxu0 0.0
    %618 = vmatprep.subr.mxu0 0.0
    %619 = vmatpush2.msra.mxu0 0.0
    %620 = vmatprep.subr.mxu0 0.0
    %621 = vmatpush2.msra.mxu0 0.0
    %622 = vmatprep.subr.mxu0 0.0
    %623 = vmatpush2.msra.mxu0 0.0
    %624 = vmatprep.subr.mxu0 0.0
    %625 = vmatpush2.msra.mxu0 0.0
    %626 = vmatprep.subr.mxu0 0.0
    %627 = vmatpush2.msra.mxu0 0.0
    %628 = vmatprep.subr.mxu0 0.0
    %629 = vmatpush2.msra.mxu0 0.0
    %630 = vmatprep.subr.mxu0 0.0
    %631 = vmatpush2.msra.mxu0 0.0
    %632 = vmatprep.subr.mxu0 0.0
    %633 = vmatpush2.msra.mxu0 0.0
    %634 = vmatprep.subr.mxu0 0.0
    %635 = vmatpush2.msra.mxu0 0.0
    %636 = vmatprep.subr.mxu0 0.0
    %637 = vmatpush2.msra.mxu0 0.0
    %638 = vmatprep.subr.mxu0 0.0
    %639 = vmatpush2.msra.mxu0 0.0
    %640 = vmatprep.subr.mxu0 0.0
    %641 = vmatpush2.msra.mxu0 0.0
    %642 = vmatprep.subr.mxu0 0.0
    %643 = vmatpush2.msra.mxu0 0.0
    %644 = vmatprep.subr.mxu0 0.0
    %645 = vmatpush2.msra.mxu0 0.0
    %646 = vmatprep.mubr.f32.mxu0 0.0
    %647 = vmatmul.mubr.f32.gmra.mxu0 %v580
    %v648 = vpop.f32.mrf.mxu0
    %v649 = vadd.f32 %v578, %v648
    %v650 = vpop.f32.mrf.mxu0
    %651 = vdwg.mxu0
    %v652 = vmax.f32 %v649, 0.0
    %v653 = vld [vmem:[#allocation5 + $0xa8] sm:$0xf]
    %v654 = vld [vmem:[#allocation5 + $0xac] sm:$0x1]
    %v655 = vlaneseq
    %v656 = vshrl.u32 %v655, 7
    %v657 = vsub.s32 0, %v656
    %v658 = vrot.slane %v654, %v657
    %v660 = vsel %vm296, %v652, 0
    %v663 = vsel %vm300, %v653, 0
    %665 = vmatprep.subr.mxu0 0.0
    %666 = vmatpush1.msra.mxu0 0.0
    %667 = vmatprep.subr.mxu0 0.0
    %668 = vmatpush1.msra.mxu0 0.0
    %669 = vmatprep.subr.mxu0 0.0
    %670 = vmatpush1.msra.mxu0 0.0
    %671 = vmatprep.subr.mxu0 0.0
    %672 = vmatpush1.msra.mxu0 0.0
    %673 = vmatprep.subr.mxu0 0.0
    %674 = vmatpush1.msra.mxu0 0.0
    %675 = vmatprep.subr.mxu0 0.0
    %676 = vmatpush1.msra.mxu0 0.0
    %677 = vmatprep.subr.mxu0 0.0
    %678 = vmatpush1.msra.mxu0 0.0
    %679 = vmatprep.subr.mxu0 0.0
    %680 = vmatpush1.msra.mxu0 0.0
    %681 = vmatprep.subr.mxu0 0.0
    %682 = vmatpush1.msra.mxu0 0.0
    %683 = vmatprep.subr.mxu0 0.0
    %684 = vmatpush1.msra.mxu0 0.0
    %685 = vmatprep.subr.mxu0 0.0
    %686 = vmatpush1.msra.mxu0 0.0
    %687 = vmatprep.subr.mxu0 0.0
    %688 = vmatpush1.msra.mxu0 0.0
    %689 = vmatprep.subr.mxu0 0.0
    %690 = vmatpush1.msra.mxu0 0.0
    %691 = vmatprep.subr.mxu0 0.0
    %692 = vmatpush1.msra.mxu0 0.0
    %693 = vmatprep.subr.mxu0 0.0
    %694 = vmatpush1.msra.mxu0 0.0
    %695 = vmatprep.subr.mxu0 0.0
    %696 = vmatpush1.msra.mxu0 %v663
    %697 = vmatprep.subr.mxu0 0.0
    %698 = vmatpush2.msra.mxu0 0.0
    %699 = vmatprep.subr.mxu0 0.0
    %700 = vmatpush2.msra.mxu0 0.0
    %701 = vmatprep.subr.mxu0 0.0
    %702 = vmatpush2.msra.mxu0 0.0
    %703 = vmatprep.subr.mxu0 0.0
    %704 = vmatpush2.msra.mxu0 0.0
    %705 = vmatprep.subr.mxu0 0.0
    %706 = vmatpush2.msra.mxu0 0.0
    %707 = vmatprep.subr.mxu0 0.0
    %708 = vmatpush2.msra.mxu0 0.0
    %709 = vmatprep.subr.mxu0 0.0
    %710 = vmatpush2.msra.mxu0 0.0
    %711 = vmatprep.subr.mxu0 0.0
    %712 = vmatpush2.msra.mxu0 0.0
    %713 = vmatprep.subr.mxu0 0.0
    %714 = vmatpush2.msra.mxu0 0.0
    %715 = vmatprep.subr.mxu0 0.0
    %716 = vmatpush2.msra.mxu0 0.0
    %717 = vmatprep.subr.mxu0 0.0
    %718 = vmatpush2.msra.mxu0 0.0
    %719 = vmatprep.subr.mxu0 0.0
    %720 = vmatpush2.msra.mxu0 0.0
    %721 = vmatprep.subr.mxu0 0.0
    %722 = vmatpush2.msra.mxu0 0.0
    %723 = vmatprep.subr.mxu0 0.0
    %724 = vmatpush2.msra.mxu0 0.0
    %725 = vmatprep.subr.mxu0 0.0
    %726 = vmatpush2.msra.mxu0 0.0
    %727 = vmatprep.subr.mxu0 0.0
    %728 = vmatpush2.msra.mxu0 0.0
    %729 = vmatprep.mubr.f32.mxu0 0.0
    %730 = vmatmul.mubr.f32.gmra.mxu0 %v660
    %v731 = vpop.f32.mrf.mxu0
    %v732 = vadd.f32 %v658, %v731
    %v733 = vpop.f32.mrf.mxu0
    %734 = vdwg.mxu0
    %v735 = vxor.u32 %v732, 2147483648
    %v736 = vmul.f32 %v735, 1.442695
    %v737 = vpow.pop %v736
    %v738 = vadd.f32 %v737, 1.0
    %v739 = vrcp.pop %v738
    %v740 = vmul.f32 1.0, %v739
    %v741 = vxor.u32 %v371, 2147483648
    %v742 = vmul.f32 %v741, 1.442695
    %v743 = vpow.pop %v742
    %v744 = vadd.f32 %v743, 1.0
    %v745 = vrcp.pop %v744
    %v746 = vmul.f32 1.0, %v745
    %v747 = vmax.f32 %v746, 1e-07
    %v748 = vmin.f32 %v747, 0.9999999
    %v749 = vmul.f32 %v748, %v740
    %vm750 = vcmp.gt.f32.partialorder %v38, 0.0
    %752 = vrot.lane.b32.xlu0 %v749, 33
    %v753 = vpop.permute.xlu0 %752
    %v755 = vsel %vm750, %v753, 0.5
    %v756 = vlog2.pop %v755
    %v757 = vmul.f32 %v756, 0.6931472
    %759 = vrot.lane.b32.xlu0 %v757, 95
    %v760 = vpop.permute.xlu0 %759
    %v762 = vmul.f32 %v748, %v760
    %v763 = vsub.f32 1.0, %v748
    %v764 = vsub.f32 1.0, %v755
    %v765 = vlog2.pop %v764
    %v766 = vmul.f32 %v765, 0.6931472
    %768 = vrot.lane.b32.xlu0 %v766, 95
    %v769 = vpop.permute.xlu0 %768
    %v771 = vmul.f32 %v763, %v769
    %v772 = vadd.f32 %v762, %v771
    %v773 = vsub.f32 0.0, %v772
    %775 = vrot.lane.b32.xlu0 %v773, 33
    %v776 = vpop.permute.xlu0 %775
    %v778 = vsel %vm750, %v776, 0.0
    %780 = vrot.lane.b32.xlu0 %v748, 33
    %v781 = vpop.permute.xlu0 %780
    %v783 = vmul.f32 %v38, %v781
    %v784 = vsub.f32 1.0, %v38
    %v785 = vmul.f32 %v784, %v753
    %v786 = vadd.f32 %v783, %v785
    %v787 = vsub.f32 1.0, %v786
    %v788 = vadd.f32 %v787, 1e-07
    %v789 = vrcp.pop %v788
    %v790 = vmul.f32 %v786, %v789
    %v791 = vlog2.pop %v790
    %v792 = vmul.f32 %v791, 0.6931472
    %794 = vrot.lane.b32.xlu0 %v792, 95
    %v795 = vpop.permute.xlu0 %794
    %798 = vrot.lane.b32.xlu0 %v371, 1
    %v799 = vpop.permute.xlu0 %798
    %802 = vrot.lane.b32.xlu0 %v778, 97
    %v803 = vpop.permute.xlu0 %802
    %805 = vrot.lane.b32.xlu0 %v38, 98
    %v806 = vpop.permute.xlu0 %805
    %809 = vrot.lane.b32.xlu0 %v555, 4
    %v810 = vpop.permute.xlu0 %809
    %vm812 = vcmask 7168
    %v813 = vsel %vm812, %v795, %v799
    %vm814 = vcmask 15360
    %v815 = vsel %vm814, %v813, %v803
    %vm816 = vcmask 23552
    %v817 = vsel %vm816, %v815, %v806
    %v818 = vsel %vm296, %v817, %v810
    %vm819 = vcmask 39936
    %v820 = vsel %vm819, %v818, 0.0
    %821 = vst [vmem:[#allocation7] sm:$0xff] %v820
    // Predicated region
    $region18: #{tpu_custom_call.1} parent=1 // pred_check
      _
    $region19: #{tpu_custom_call.1} parent=1 // pred_check_branch
      %823 = sbr.rel (0) target = $region21
    $region20: #{tpu_custom_call.1} parent=1 // pred_region
      %s825 = ssub.s32 128, 128
      %826 = vsyncadd [#allocation4], %s825
      %s828 = sshll.u32 [#allocation7], 4
      %s829 = int_to_ptr.vmem [resolvable:$true] %s828
      %831 = dma.vmem_to_hbm [thread:$0]  %s829, 128, %s2, [#allocation4]
    $region21: #{tpu_custom_call.1} parent=1 // pred_fallthru
      _
    // Predicated region
    $region22: #{tpu_custom_call.1} parent=1 // pred_check
      _
    $region23: #{tpu_custom_call.1} parent=1 // pred_check_branch
      %833 = sbr.rel (0) target = $region25
    $region24: #{tpu_custom_call.1} parent=1 // pred_region
      %834 = dma.done [#allocation4], 128
    $region25: #{tpu_custom_call.1} parent=1 // pred_fallthru
      _
    %835 = vsyncpa [#allocation3], 1
    %836 = vsyncpa [#allocation6], 1
    %837 = vsyncpa [#allocation4], 1

</llo_original>
